<compile_context>
chip_gen: v5e
topology: v5e:2x2
jax: 0.10.0
libtpu: 0.0.40
codegen_flags: <defaults>
</compile_context>

<pallas_src>
import numpy as np
import jax
import jax.numpy as jnp
from jax import lax
from jax.experimental import pallas as pl
from jax.experimental.pallas import tpu as pltpu

NEG_SLOPE = 0.2
HOP_DIV = 4


# ----------------------------- spectrogram prep -----------------------------

def hann_window(n):
    t = np.arange(n)
    return 0.5 - 0.5 * np.cos(2.0 * np.pi * t / n)


def dft_matrix(n):
    """(n, n+2) windowed real-DFT matrix; columns = [Re(bin 0..n/2), Im(bin 0..n/2)]."""
    f = np.arange(n // 2 + 1)
    t = np.arange(n)
    ang = 2.0 * np.pi * np.outer(t, f) / n            # (n, F)
    win = hann_window(n)[:, None]
    real = win * np.cos(ang)
    imag = -win * np.sin(ang)
    return np.concatenate([real, imag], axis=1).astype(np.float32)


def frame_signal(x, n, hop):
    """x: (B, T) -> frames (B, nF, n)   (center=False framing). Reference path only."""
    _, T = x.shape
    n_frames = (T - n) // hop + 1
    idx = np.arange(n_frames)[:, None] * hop + np.arange(n)[None, :]
    return x[:, idx]


def _vmem_limit_bytes():
    """Per-generation VMEM budget: ~80% of physical, capped at 100 MiB."""
    cap = 64 * 1024 * 1024
    try:
        cap = int(pltpu.get_tpu_info().vmem_capacity_bytes)
    except Exception:
        pass
    return min(int(cap * 0.8), 100 * 1024 * 1024)


# ------------------------ fused per-scale Pallas kernel ----------------------

def _build_scale_pallas(B, nR, hop, R, chans, times, K, S, out_size, slope):
    """chans=[C0..C_L] (C0=n+2), times=[T0..T_L]; conv layer i: chans[i]->chans[i+1].

    nR = n_frames + R - 1 audio rows of `hop` samples each; frame t is the
    concatenation of rows t..t+R-1 (R = n/hop), absorbed into R sub-matmuls.
    """
    L = len(chans) - 1
    pad = K // 2
    n_in = 2 + 2 * L + 2
    n_out = L + 1

    def kernel(*refs):
        audio_ref, wdft_ref = refs[0], refs[1]
        layer_refs = refs[2:2 + 2 * L]
        wlast_ref, blast_ref = refs[2 + 2 * L], refs[2 + 2 * L + 1]
        feat_refs = refs[n_in:n_in + n_out]
        bufs = refs[n_in + n_out:]

        # Zero only the pad margins (2*pad rows per buffer); interiors are
        # fully overwritten below, so no full-buffer memset is needed.
        for i in range(L):
            z = jnp.zeros((pad, chans[i]), jnp.float32)
            bufs[i][pl.ds(0, pad), :] = z
            bufs[i][pl.ds(pad + times[i], pad), :] = z

        # "layer 0": complex spectrogram.  Each DFT frame = R consecutive
        # audio rows, so spec = sum_r audio[r : r+nF] @ Wdft[r-th hop slab].
        spec = jnp.zeros((times[0], chans[0]), jnp.float32)
        for r in range(R):
            spec = spec + jnp.dot(audio_ref[0, r:r + times[0], :], wdft_ref[r],
                                  preferred_element_type=jnp.float32)
        bufs[0][pl.ds(pad, times[0]), :] = spec

        x_buf = bufs[0]
        post = None
        for i in range(L):
            t_out = times[i + 1]
            w_ref = layer_refs[2 * i]        # (K*Cin, Cout) bf16, VMEM-resident
            b_ref = layer_refs[2 * i + 1]    # (1, Cout)     f32
            # In-kernel im2col: K strided tap slices concatenated along the
            # channel axis -> one deep MXU matmul instead of K shallow ones.
            xt = jnp.concatenate(
                [x_buf[pl.ds(k, t_out, stride=S), :] for k in range(K)],
                axis=-1).astype(jnp.bfloat16)                        # (t_out, K*Cin)
            acc = jnp.dot(xt, w_ref[...],
                          preferred_element_type=jnp.float32) + b_ref[...]
            # Pre-activation feature, stored channel-first (lane axis = time).
            feat_refs[i][0] = jnp.transpose(acc, (1, 0))
            post = jnp.where(acc >= 0, acc, slope * acc)             # fused LeakyReLU
            if i + 1 < L:                                            # next conv input (padded)
                bufs[i + 1][pl.ds(pad, t_out), :] = post
                x_buf = bufs[i + 1]

        # final 1x1 conv, fused; its input stays in registers (no scratch).
        y = jnp.dot(post.astype(jnp.bfloat16), wlast_ref[...],
                    preferred_element_type=jnp.float32) + blast_ref[...]
        feat_refs[L][0] = jnp.transpose(y, (1, 0))

    # ---- specs: audio rows streamed per batch, all weights/bias blocks resident ----
    in_specs = [pl.BlockSpec((1, nR, hop), lambda b: (b, 0, 0)),
                pl.BlockSpec((R, hop, chans[0]), lambda b: (0, 0, 0))]
    for i in range(L):
        in_specs.append(pl.BlockSpec((K * chans[i], chans[i + 1]), lambda b: (0, 0)))
        in_specs.append(pl.BlockSpec((1, chans[i + 1]), lambda b: (0, 0)))
    in_specs.append(pl.BlockSpec((chans[L], out_size), lambda b: (0, 0)))
    in_specs.append(pl.BlockSpec((1, out_size), lambda b: (0, 0)))

    out_shapes, out_specs = [], []
    for i in range(L):
        out_shapes.append(jax.ShapeDtypeStruct((B, chans[i + 1], times[i + 1]), jnp.float32))
        out_specs.append(pl.BlockSpec((1, chans[i + 1], times[i + 1]), lambda b: (b, 0, 0)))
    out_shapes.append(jax.ShapeDtypeStruct((B, out_size, times[L]), jnp.float32))
    out_specs.append(pl.BlockSpec((1, out_size, times[L]), lambda b: (b, 0, 0)))

    scratch = [pltpu.VMEM((times[i] + 2 * pad, chans[i]), jnp.float32) for i in range(L)]

    return pl.pallas_call(
        kernel,
        out_shape=tuple(out_shapes),
        grid_spec=pltpu.PrefetchScalarGridSpec(
            num_scalar_prefetch=0,
            grid=(B,),
            in_specs=in_specs,
            out_specs=tuple(out_specs),
            scratch_shapes=scratch),
        compiler_params=pltpu.CompilerParams(
            dimension_semantics=("parallel",),         # batches split across TCs on megacore
            vmem_limit_bytes=_vmem_limit_bytes()),
    )


def scale_forward_pallas(params, audio, n, K, S, slope):
    """audio: (B, T) mono; returns (score (B,), features [(B, C, t), ...])."""
    B, T = audio.shape
    hop = n // HOP_DIV
    R = n // hop                              # rows per DFT frame (= HOP_DIV)
    nF = (T - n) // hop + 1
    nR = nF + R - 1                           # audio rows actually needed

    wdft = jnp.asarray(dft_matrix(n))         # (n, n+2) f32
    F2 = wdft.shape[1]
    conv_params, (w_last, b_last) = params[:-1], params[-1]
    out_size = w_last.shape[0]
    chans = [F2] + [w.shape[0] for (w, _) in conv_params]
    pad = K // 2
    times = [nF]
    for _ in conv_params:
        times.append((times[-1] + 2 * pad - K) // S + 1)

    call = _build_scale_pallas(B, nR, hop, R, chans, times, K, S, out_size, slope)

    # Raw audio rows (no 4x overlapping-frame expansion in HBM).
    rows = audio[:, :nR * hop].reshape(B, nR, hop).astype(jnp.bfloat16)
    wdft_split = wdft.reshape(R, hop, F2).astype(jnp.bfloat16)

    args = [rows, wdft_split]
    for (w, b) in conv_params:
        cout, cin, k = w.shape
        # (Cout, Cin, K) -> (K*Cin, Cout), matching the in-kernel im2col order.
        args.append(jnp.transpose(w, (2, 1, 0)).reshape(k * cin, cout).astype(jnp.bfloat16))
        args.append(b.reshape(1, -1).astype(jnp.float32))
    args.append(jnp.transpose(w_last[:, :, 0], (1, 0)).astype(jnp.bfloat16))  # (C_L, out)
    args.append(b_last.reshape(1, -1).astype(jnp.float32))

    feats = list(call(*args))                  # already PyTorch NCL layout (B, C, t)
    score = jnp.mean(feats[-1].reshape(B, -1), axis=-1)
    return score, feats


def mssd_forward_pallas(all_params, x, scales, K, S, slope):
    """x: (B, 1, T) mono audio -> (score (B,), features list of (B, C, T_l))."""
    xb = x[:, 0, :]
    score = jnp.zeros((x.shape[0],), jnp.float32)
    features = []
    for params, n in zip(all_params, scales):
        s, f = scale_forward_pallas(params, xb, n, K, S, slope)
        score = score + s
        features.extend(f)
    return score, features


# ------------------------------ pure-JAX reference ---------------------------

def _conv1d_ref(x, w, b, stride, pad):
    out = lax.conv_general_dilated(
        x, w, window_strides=(stride,), padding=((pad, pad),),
        dimension_numbers=('NCH', 'OIH', 'NCH'))
    return out + b[None, :, None]


def convnet_forward_ref(params, spec, K, S, slope):
    feats = []
    pad = K // 2
    x = spec
    for (w, b) in params[:-1]:
        x = _conv1d_ref(x, w, b, S, pad)
        feats.append(x)
        x = jnp.where(x >= 0, x, slope * x)
    w, b = params[-1]
    x = _conv1d_ref(x, w, b, 1, 0)
    feats.append(x)
    score = jnp.mean(x.reshape(x.shape[0], -1), axis=-1)
    return score, feats


def mssd_forward_ref(all_params, x, scales, K, S, slope):
    xb = x[:, 0, :]
    score = jnp.zeros((x.shape[0],), jnp.float32)
    features = []
    for params, n in zip(all_params, scales):
        frames = frame_signal(xb, n, n // HOP_DIV)
        wdft = jnp.asarray(dft_matrix(n))
        spec = jnp.einsum('btn,nc->bct', frames, wdft)      # (B, n+2, nF)
        s, f = convnet_forward_ref(params, spec, K, S, slope)
        score = score + s
        features.extend(f)
    return score, features


# ---------------------------------- params -----------------------------------

def init_convnet_params(key, in_size, out_size, capacity, n_layers, K):
    channels = [in_size] + [capacity * (2 ** i) for i in range(n_layers)]
    params = []
    for i in range(n_layers):
        key, k1, k2 = jax.random.split(key, 3)
        w = 0.05 * jax.random.normal(k1, (channels[i + 1], channels[i], K), jnp.float32)
        b = 0.05 * jax.random.normal(k2, (channels[i + 1],), jnp.float32)
        params.append((w, b))
    key, k1, k2 = jax.random.split(key, 3)
    w = 0.05 * jax.random.normal(k1, (out_size, channels[-1], 1), jnp.float32)
    b = 0.05 * jax.random.normal(k2, (out_size,), jnp.float32)
    params.append((w, b))
    return params


# ------------------------------------ main ------------------------------------

if __name__ == "__main__":
    key = jax.random.PRNGKey(0)

    B, T = 2, 256                        # mono audio (B, 1, T)
    scales = (32, 64)                    # in_size per scale = n + 2 (real|imag bins)
    capacity, n_layers, K, stride, out_size = 4, 2, 5, 2, 1

    key, kx = jax.random.split(key)
    x = jax.random.normal(kx, (B, 1, T), jnp.float32)

    all_params = []
    for n in scales:
        key, kp = jax.random.split(key)
        all_params.append(init_convnet_params(kp, n + 2, out_size, capacity, n_layers, K))

    score, feats = mssd_forward_pallas(all_params, x, scales, K, stride, NEG_SLOPE)
    score = jax.block_until_ready(score)
    feats = jax.block_until_ready(feats)

    ref_score, ref_feats = mssd_forward_ref(all_params, x, scales, K, stride, NEG_SLOPE)

    assert len(feats) == len(ref_feats) == len(scales) * (n_layers + 1)

    def check(a, b, name):
        a = np.asarray(a)
        b = np.asarray(b)
        assert a.shape == b.shape, (name, a.shape, b.shape)
        tol = 5e-2 * max(1.0, float(np.abs(b).max()))   # bf16 MXU inputs, f32 accumulation
        np.testing.assert_allclose(a, b, rtol=5e-2, atol=tol, err_msg=name)

    check(score, ref_score, "score")
    for idx, (a, b) in enumerate(zip(feats, ref_feats)):
        check(a, b, f"feature_{idx}")

    print("KERNEL_OK")
</pallas_src>

<mosaic_0001>
module attributes {stable_mosaic.version = 11 : i64} {
  func.func @kernel(%arg0: i32, %arg1: memref<1x32x8xbf16, #tpu.memory_space<vmem>>, %arg2: memref<4x8x34xbf16, #tpu.memory_space<vmem>>, %arg3: memref<170x4xbf16, #tpu.memory_space<vmem>>, %arg4: memref<1x4xf32, #tpu.memory_space<vmem>>, %arg5: memref<20x8xbf16, #tpu.memory_space<vmem>>, %arg6: memref<1x8xf32, #tpu.memory_space<vmem>>, %arg7: memref<8x1xbf16, #tpu.memory_space<vmem>>, %arg8: memref<1x1xf32, #tpu.memory_space<vmem>>, %arg9: memref<1x4x15xf32, #tpu.memory_space<vmem>>, %arg10: memref<1x8x8xf32, #tpu.memory_space<vmem>>, %arg11: memref<1x1x8xf32, #tpu.memory_space<vmem>>, %arg12: memref<33x34xf32, #tpu.memory_space<vmem>>, %arg13: memref<19x4xf32, #tpu.memory_space<vmem>>) attributes {dimension_semantics = [#tpu.dimension_semantics<parallel>], iteration_bounds = array<i64: 2>, scalar_prefetch = 0 : i64, scratch_operands = 2 : i64, tpu.core_type = #tpu.core_type<tc>, window_params = [{transform_indices = @transform_0, window_bounds = array<i64: 1, 32, 8>}, {pipeline_mode = #tpu.pipeline_mode<synchronous>, transform_indices = @transform_1, window_bounds = array<i64: 4, 8, 34>}, {pipeline_mode = #tpu.pipeline_mode<synchronous>, transform_indices = @transform_2, window_bounds = array<i64: 170, 4>}, {pipeline_mode = #tpu.pipeline_mode<synchronous>, transform_indices = @transform_3, window_bounds = array<i64: 1, 4>}, {pipeline_mode = #tpu.pipeline_mode<synchronous>, transform_indices = @transform_4, window_bounds = array<i64: 20, 8>}, {pipeline_mode = #tpu.pipeline_mode<synchronous>, transform_indices = @transform_5, window_bounds = array<i64: 1, 8>}, {pipeline_mode = #tpu.pipeline_mode<synchronous>, transform_indices = @transform_6, window_bounds = array<i64: 8, 1>}, {pipeline_mode = #tpu.pipeline_mode<synchronous>, transform_indices = @transform_7, window_bounds = array<i64: 1, 1>}, {transform_indices = @transform_8, window_bounds = array<i64: 1, 4, 15>}, {transform_indices = @transform_9, window_bounds = array<i64: 1, 8, 8>}, {transform_indices = @transform_10, window_bounds = array<i64: 1, 1, 8>}]} {
    %cst = arith.constant 0.000000e+00 : f32
    %0 = vector.broadcast %cst : f32 to vector<2x34xf32>
    %c0 = arith.constant 0 : index
    %c0_0 = arith.constant 0 : index
    %1 = vector.load %arg12[%c0, %c0_0] : memref<33x34xf32, #tpu.memory_space<vmem>>, vector<2x34xf32>
    tpu.vector_store %arg12[%c0, %c0_0], %0 {strides = array<i32>} : memref<33x34xf32, #tpu.memory_space<vmem>>, vector<2x34xf32>,
    %c31 = arith.constant 31 : index
    %c0_1 = arith.constant 0 : index
    %2 = vector.load %arg12[%c31, %c0_1] : memref<33x34xf32, #tpu.memory_space<vmem>>, vector<2x34xf32>
    tpu.vector_store %arg12[%c31, %c0_1], %0 {strides = array<i32>} : memref<33x34xf32, #tpu.memory_space<vmem>>, vector<2x34xf32>,
    %cst_2 = arith.constant 0.000000e+00 : f32
    %3 = vector.broadcast %cst_2 : f32 to vector<2x4xf32>
    %c0_3 = arith.constant 0 : index
    %c0_4 = arith.constant 0 : index
    %4 = vector.load %arg13[%c0_3, %c0_4] : memref<19x4xf32, #tpu.memory_space<vmem>>, vector<2x4xf32>
    tpu.vector_store %arg13[%c0_3, %c0_4], %3 {strides = array<i32>} : memref<19x4xf32, #tpu.memory_space<vmem>>, vector<2x4xf32>,
    %c17 = arith.constant 17 : index
    %c0_5 = arith.constant 0 : index
    %5 = vector.load %arg13[%c17, %c0_5] : memref<19x4xf32, #tpu.memory_space<vmem>>, vector<2x4xf32>
    tpu.vector_store %arg13[%c17, %c0_5], %3 {strides = array<i32>} : memref<19x4xf32, #tpu.memory_space<vmem>>, vector<2x4xf32>,
    %cst_6 = arith.constant 0.000000e+00 : f32
    %6 = vector.broadcast %cst_6 : f32 to vector<29x34xf32>
    %c0_7 = arith.constant 0 : index
    %c0_8 = arith.constant 0 : index
    %c0_9 = arith.constant 0 : index
    %7 = vector.load %arg1[%c0_7, %c0_8, %c0_9] : memref<1x32x8xbf16, #tpu.memory_space<vmem>>, vector<1x29x8xbf16>
    %8 = vector.shape_cast %7 : vector<1x29x8xbf16> to vector<29x8xbf16>
    %c0_10 = arith.constant 0 : index
    %c0_11 = arith.constant 0 : index
    %c0_12 = arith.constant 0 : index
    %9 = vector.load %arg2[%c0_10, %c0_11, %c0_12] : memref<4x8x34xbf16, #tpu.memory_space<vmem>>, vector<1x8x34xbf16>
    %10 = vector.shape_cast %9 : vector<1x8x34xbf16> to vector<8x34xbf16>
    %cst_13 = arith.constant dense<0.000000e+00> : vector<29x34xf32>
    %11 = tpu.matmul %8, %10, %cst_13 {dimension_numbers = #tpu.dot_dimension_numbers<[1], [0], [0], [1], [0, 0, 1, 1], [], []>} : vector<29x8xbf16>, vector<8x34xbf16>, vector<29x34xf32> -> vector<29x34xf32>
    %12 = arith.addf %6, %11 : vector<29x34xf32>
    %c0_14 = arith.constant 0 : index
    %c1 = arith.constant 1 : index
    %c0_15 = arith.constant 0 : index
    %13 = vector.load %arg1[%c0_14, %c1, %c0_15] : memref<1x32x8xbf16, #tpu.memory_space<vmem>>, vector<1x29x8xbf16>
    %14 = vector.shape_cast %13 : vector<1x29x8xbf16> to vector<29x8xbf16>
    %c1_16 = arith.constant 1 : index
    %c0_17 = arith.constant 0 : index
    %c0_18 = arith.constant 0 : index
    %15 = vector.load %arg2[%c1_16, %c0_17, %c0_18] : memref<4x8x34xbf16, #tpu.memory_space<vmem>>, vector<1x8x34xbf16>
    %16 = vector.shape_cast %15 : vector<1x8x34xbf16> to vector<8x34xbf16>
    %cst_19 = arith.constant dense<0.000000e+00> : vector<29x34xf32>
    %17 = tpu.matmul %14, %16, %cst_19 {dimension_numbers = #tpu.dot_dimension_numbers<[1], [0], [0], [1], [0, 0, 1, 1], [], []>} : vector<29x8xbf16>, vector<8x34xbf16>, vector<29x34xf32> -> vector<29x34xf32>
    %18 = arith.addf %12, %17 : vector<29x34xf32>
    %c0_20 = arith.constant 0 : index
    %c2 = arith.constant 2 : index
    %c0_21 = arith.constant 0 : index
    %19 = vector.load %arg1[%c0_20, %c2, %c0_21] : memref<1x32x8xbf16, #tpu.memory_space<vmem>>, vector<1x29x8xbf16>
    %20 = vector.shape_cast %19 : vector<1x29x8xbf16> to vector<29x8xbf16>
    %c2_22 = arith.constant 2 : index
    %c0_23 = arith.constant 0 : index
    %c0_24 = arith.constant 0 : index
    %21 = vector.load %arg2[%c2_22, %c0_23, %c0_24] : memref<4x8x34xbf16, #tpu.memory_space<vmem>>, vector<1x8x34xbf16>
    %22 = vector.shape_cast %21 : vector<1x8x34xbf16> to vector<8x34xbf16>
    %cst_25 = arith.constant dense<0.000000e+00> : vector<29x34xf32>
    %23 = tpu.matmul %20, %22, %cst_25 {dimension_numbers = #tpu.dot_dimension_numbers<[1], [0], [0], [1], [0, 0, 1, 1], [], []>} : vector<29x8xbf16>, vector<8x34xbf16>, vector<29x34xf32> -> vector<29x34xf32>
    %24 = arith.addf %18, %23 : vector<29x34xf32>
    %c0_26 = arith.constant 0 : index
    %c3 = arith.constant 3 : index
    %c0_27 = arith.constant 0 : index
    %25 = vector.load %arg1[%c0_26, %c3, %c0_27] : memref<1x32x8xbf16, #tpu.memory_space<vmem>>, vector<1x29x8xbf16>
    %26 = vector.shape_cast %25 : vector<1x29x8xbf16> to vector<29x8xbf16>
    %c3_28 = arith.constant 3 : index
    %c0_29 = arith.constant 0 : index
    %c0_30 = arith.constant 0 : index
    %27 = vector.load %arg2[%c3_28, %c0_29, %c0_30] : memref<4x8x34xbf16, #tpu.memory_space<vmem>>, vector<1x8x34xbf16>
    %28 = vector.shape_cast %27 : vector<1x8x34xbf16> to vector<8x34xbf16>
    %cst_31 = arith.constant dense<0.000000e+00> : vector<29x34xf32>
    %29 = tpu.matmul %26, %28, %cst_31 {dimension_numbers = #tpu.dot_dimension_numbers<[1], [0], [0], [1], [0, 0, 1, 1], [], []>} : vector<29x8xbf16>, vector<8x34xbf16>, vector<29x34xf32> -> vector<29x34xf32>
    %30 = arith.addf %24, %29 : vector<29x34xf32>
    %c2_32 = arith.constant 2 : index
    %c0_33 = arith.constant 0 : index
    %31 = vector.load %arg12[%c2_32, %c0_33] : memref<33x34xf32, #tpu.memory_space<vmem>>, vector<29x34xf32>
    tpu.vector_store %arg12[%c2_32, %c0_33], %30 {strides = array<i32>} : memref<33x34xf32, #tpu.memory_space<vmem>>, vector<29x34xf32>,
    %c0_34 = arith.constant 0 : index
    %c0_35 = arith.constant 0 : index
    %32 = tpu.strided_load %arg12[%c0_34, %c0_35] {strides = array<i32: 2, 1>} : memref<33x34xf32, #tpu.memory_space<vmem>>, vector<15x34xf32>
    %c1_36 = arith.constant 1 : index
    %c0_37 = arith.constant 0 : index
    %33 = tpu.strided_load %arg12[%c1_36, %c0_37] {strides = array<i32: 2, 1>} : memref<33x34xf32, #tpu.memory_space<vmem>>, vector<15x34xf32>
    %c2_38 = arith.constant 2 : index
    %c0_39 = arith.constant 0 : index
    %34 = tpu.strided_load %arg12[%c2_38, %c0_39] {strides = array<i32: 2, 1>} : memref<33x34xf32, #tpu.memory_space<vmem>>, vector<15x34xf32>
    %c3_40 = arith.constant 3 : index
    %c0_41 = arith.constant 0 : index
    %35 = tpu.strided_load %arg12[%c3_40, %c0_41] {strides = array<i32: 2, 1>} : memref<33x34xf32, #tpu.memory_space<vmem>>, vector<15x34xf32>
    %c4 = arith.constant 4 : index
    %c0_42 = arith.constant 0 : index
    %36 = tpu.strided_load %arg12[%c4, %c0_42] {strides = array<i32: 2, 1>} : memref<33x34xf32, #tpu.memory_space<vmem>>, vector<15x34xf32>
    %37 = tpu.concatenate %32, %33, %34, %35, %36 in 1 : vector<15x34xf32>, vector<15x34xf32>, vector<15x34xf32>, vector<15x34xf32>, vector<15x34xf32> -> vector<15x170xf32>
    %38 = arith.truncf %37 : vector<15x170xf32> to vector<15x170xbf16>
    %c0_43 = arith.constant 0 : index
    %c0_44 = arith.constant 0 : index
    %39 = vector.load %arg3[%c0_43, %c0_44] : memref<170x4xbf16, #tpu.memory_space<vmem>>, vector<170x4xbf16>
    %cst_45 = arith.constant dense<0.000000e+00> : vector<15x4xf32>
    %40 = tpu.matmul %38, %39, %cst_45 {dimension_numbers = #tpu.dot_dimension_numbers<[1], [0], [0], [1], [0, 0, 1, 1], [], []>} : vector<15x170xbf16>, vector<170x4xbf16>, vector<15x4xf32> -> vector<15x4xf32>
    %c0_46 = arith.constant 0 : index
    %c0_47 = arith.constant 0 : index
    %41 = vector.load %arg4[%c0_46, %c0_47] : memref<1x4xf32, #tpu.memory_space<vmem>>, vector<1x4xf32>
    %42 = vector.broadcast %41 : vector<1x4xf32> to vector<15x4xf32>
    %43 = arith.addf %40, %42 : vector<15x4xf32>
    %44 = tpu.transpose %43, [1, 0] : vector<15x4xf32> -> vector<4x15xf32>
    %c0_48 = arith.constant 0 : index
    %c0_49 = arith.constant 0 : index
    %c0_50 = arith.constant 0 : index
    %45 = vector.load %arg9[%c0_48, %c0_49, %c0_50] : memref<1x4x15xf32, #tpu.memory_space<vmem>>, vector<1x4x15xf32>
    %46 = vector.shape_cast %45 : vector<1x4x15xf32> to vector<4x15xf32>
    %47 = vector.shape_cast %44 : vector<4x15xf32> to vector<1x4x15xf32>
    tpu.vector_store %arg9[%c0_48, %c0_49, %c0_50], %47 {strides = array<i32>} : memref<1x4x15xf32, #tpu.memory_space<vmem>>, vector<1x4x15xf32>,
    %cst_51 = arith.constant 0.000000e+00 : f32
    %48 = vector.broadcast %cst_51 : f32 to vector<15x4xf32>
    %49 = arith.cmpf oge, %43, %48 : vector<15x4xf32>
    %cst_52 = arith.constant 2.000000e-01 : f32
    %50 = vector.broadcast %cst_52 : f32 to vector<15x4xf32>
    %51 = arith.mulf %50, %43 : vector<15x4xf32>
    %52 = arith.select %49, %43, %51 : vector<15x4xi1>, vector<15x4xf32>
    %c2_53 = arith.constant 2 : index
    %c0_54 = arith.constant 0 : index
    %53 = vector.load %arg13[%c2_53, %c0_54] : memref<19x4xf32, #tpu.memory_space<vmem>>, vector<15x4xf32>
    tpu.vector_store %arg13[%c2_53, %c0_54], %52 {strides = array<i32>} : memref<19x4xf32, #tpu.memory_space<vmem>>, vector<15x4xf32>,
    %c0_55 = arith.constant 0 : index
    %c0_56 = arith.constant 0 : index
    %54 = tpu.strided_load %arg13[%c0_55, %c0_56] {strides = array<i32: 2, 1>} : memref<19x4xf32, #tpu.memory_space<vmem>>, vector<8x4xf32>
    %c1_57 = arith.constant 1 : index
    %c0_58 = arith.constant 0 : index
    %55 = tpu.strided_load %arg13[%c1_57, %c0_58] {strides = array<i32: 2, 1>} : memref<19x4xf32, #tpu.memory_space<vmem>>, vector<8x4xf32>
    %c2_59 = arith.constant 2 : index
    %c0_60 = arith.constant 0 : index
    %56 = tpu.strided_load %arg13[%c2_59, %c0_60] {strides = array<i32: 2, 1>} : memref<19x4xf32, #tpu.memory_space<vmem>>, vector<8x4xf32>
    %c3_61 = arith.constant 3 : index
    %c0_62 = arith.constant 0 : index
    %57 = tpu.strided_load %arg13[%c3_61, %c0_62] {strides = array<i32: 2, 1>} : memref<19x4xf32, #tpu.memory_space<vmem>>, vector<8x4xf32>
    %c4_63 = arith.constant 4 : index
    %c0_64 = arith.constant 0 : index
    %58 = tpu.strided_load %arg13[%c4_63, %c0_64] {strides = array<i32: 2, 1>} : memref<19x4xf32, #tpu.memory_space<vmem>>, vector<8x4xf32>
    %59 = tpu.concatenate %54, %55, %56, %57, %58 in 1 : vector<8x4xf32>, vector<8x4xf32>, vector<8x4xf32>, vector<8x4xf32>, vector<8x4xf32> -> vector<8x20xf32>
    %60 = arith.truncf %59 : vector<8x20xf32> to vector<8x20xbf16>
    %c0_65 = arith.constant 0 : index
    %c0_66 = arith.constant 0 : index
    %61 = vector.load %arg5[%c0_65, %c0_66] : memref<20x8xbf16, #tpu.memory_space<vmem>>, vector<20x8xbf16>
    %cst_67 = arith.constant dense<0.000000e+00> : vector<8x8xf32>
    %62 = tpu.matmul %60, %61, %cst_67 {dimension_numbers = #tpu.dot_dimension_numbers<[1], [0], [0], [1], [0, 0, 1, 1], [], []>} : vector<8x20xbf16>, vector<20x8xbf16>, vector<8x8xf32> -> vector<8x8xf32>
    %c0_68 = arith.constant 0 : index
    %c0_69 = arith.constant 0 : index
    %63 = vector.load %arg6[%c0_68, %c0_69] : memref<1x8xf32, #tpu.memory_space<vmem>>, vector<1x8xf32>
    %64 = vector.broadcast %63 : vector<1x8xf32> to vector<8x8xf32>
    %65 = arith.addf %62, %64 : vector<8x8xf32>
    %66 = tpu.transpose %65, [1, 0] : vector<8x8xf32> -> vector<8x8xf32>
    %c0_70 = arith.constant 0 : index
    %c0_71 = arith.constant 0 : index
    %c0_72 = arith.constant 0 : index
    %67 = vector.load %arg10[%c0_70, %c0_71, %c0_72] : memref<1x8x8xf32, #tpu.memory_space<vmem>>, vector<1x8x8xf32>
    %68 = vector.shape_cast %67 : vector<1x8x8xf32> to vector<8x8xf32>
    %69 = vector.shape_cast %66 : vector<8x8xf32> to vector<1x8x8xf32>
    tpu.vector_store %arg10[%c0_70, %c0_71, %c0_72], %69 {strides = array<i32>} : memref<1x8x8xf32, #tpu.memory_space<vmem>>, vector<1x8x8xf32>,
    %cst_73 = arith.constant 0.000000e+00 : f32
    %70 = vector.broadcast %cst_73 : f32 to vector<8x8xf32>
    %71 = arith.cmpf oge, %65, %70 : vector<8x8xf32>
    %cst_74 = arith.constant 2.000000e-01 : f32
    %72 = vector.broadcast %cst_74 : f32 to vector<8x8xf32>
    %73 = arith.mulf %72, %65 : vector<8x8xf32>
    %74 = arith.select %71, %65, %73 : vector<8x8xi1>, vector<8x8xf32>
    %75 = arith.truncf %74 : vector<8x8xf32> to vector<8x8xbf16>
    %c0_75 = arith.constant 0 : index
    %c0_76 = arith.constant 0 : index
    %76 = vector.load %arg7[%c0_75, %c0_76] : memref<8x1xbf16, #tpu.memory_space<vmem>>, vector<8x1xbf16>
    %cst_77 = arith.constant dense<0.000000e+00> : vector<8x1xf32>
    %77 = tpu.matmul %75, %76, %cst_77 {dimension_numbers = #tpu.dot_dimension_numbers<[1], [0], [0], [1], [0, 0, 1, 1], [], []>} : vector<8x8xbf16>, vector<8x1xbf16>, vector<8x1xf32> -> vector<8x1xf32>
    %c0_78 = arith.constant 0 : index
    %c0_79 = arith.constant 0 : index
    %78 = vector.load %arg8[%c0_78, %c0_79] : memref<1x1xf32, #tpu.memory_space<vmem>>, vector<1x1xf32>
    %79 = vector.broadcast %78 : vector<1x1xf32> to vector<8x1xf32>
    %80 = arith.addf %77, %79 : vector<8x1xf32>
    %81 = tpu.transpose %80, [1, 0] : vector<8x1xf32> -> vector<1x8xf32>
    %c0_80 = arith.constant 0 : index
    %c0_81 = arith.constant 0 : index
    %c0_82 = arith.constant 0 : index
    %82 = vector.load %arg11[%c0_80, %c0_81, %c0_82] : memref<1x1x8xf32, #tpu.memory_space<vmem>>, vector<1x1x8xf32>
    %83 = vector.shape_cast %82 : vector<1x1x8xf32> to vector<1x8xf32>
    %84 = vector.shape_cast %81 : vector<1x8xf32> to vector<1x1x8xf32>
    tpu.vector_store %arg11[%c0_80, %c0_81, %c0_82], %84 {strides = array<i32>} : memref<1x1x8xf32, #tpu.memory_space<vmem>>, vector<1x1x8xf32>,
    return
  }
  func.func @transform_0(%arg0: i32) -> (i32, i32, i32) {
    %c0_i32 = arith.constant 0 : i32
    %c0_i32_0 = arith.constant 0 : i32
    %c0_i32_1 = arith.constant 0 : i32
    return %arg0, %c0_i32, %c0_i32_0 : i32, i32, i32
  }
  func.func @transform_1(%arg0: i32) -> (i32, i32, i32) {
    %c0_i32 = arith.constant 0 : i32
    %c0_i32_0 = arith.constant 0 : i32
    %c0_i32_1 = arith.constant 0 : i32
    %c0_i32_2 = arith.constant 0 : i32
    return %c0_i32, %c0_i32_0, %c0_i32_1 : i32, i32, i32
  }
  func.func @transform_2(%arg0: i32) -> (i32, i32) {
    %c0_i32 = arith.constant 0 : i32
    %c0_i32_0 = arith.constant 0 : i32
    %c0_i32_1 = arith.constant 0 : i32
    return %c0_i32, %c0_i32_0 : i32, i32
  }
  func.func @transform_3(%arg0: i32) -> (i32, i32) {
    %c0_i32 = arith.constant 0 : i32
    %c0_i32_0 = arith.constant 0 : i32
    %c0_i32_1 = arith.constant 0 : i32
    return %c0_i32, %c0_i32_0 : i32, i32
  }
  func.func @transform_4(%arg0: i32) -> (i32, i32) {
    %c0_i32 = arith.constant 0 : i32
    %c0_i32_0 = arith.constant 0 : i32
    %c0_i32_1 = arith.constant 0 : i32
    return %c0_i32, %c0_i32_0 : i32, i32
  }
  func.func @transform_5(%arg0: i32) -> (i32, i32) {
    %c0_i32 = arith.constant 0 : i32
    %c0_i32_0 = arith.constant 0 : i32
    %c0_i32_1 = arith.constant 0 : i32
    return %c0_i32, %c0_i32_0 : i32, i32
  }
  func.func @transform_6(%arg0: i32) -> (i32, i32) {
    %c0_i32 = arith.constant 0 : i32
    %c0_i32_0 = arith.constant 0 : i32
    %c0_i32_1 = arith.constant 0 : i32
    return %c0_i32, %c0_i32_0 : i32, i32
  }
  func.func @transform_7(%arg0: i32) -> (i32, i32) {
    %c0_i32 = arith.constant 0 : i32
    %c0_i32_0 = arith.constant 0 : i32
    %c0_i32_1 = arith.constant 0 : i32
    return %c0_i32, %c0_i32_0 : i32, i32
  }
  func.func @transform_8(%arg0: i32) -> (i32, i32, i32) {
    %c0_i32 = arith.constant 0 : i32
    %c0_i32_0 = arith.constant 0 : i32
    %c0_i32_1 = arith.constant 0 : i32
    return %arg0, %c0_i32, %c0_i32_0 : i32, i32, i32
  }
  func.func @transform_9(%arg0: i32) -> (i32, i32, i32) {
    %c0_i32 = arith.constant 0 : i32
    %c0_i32_0 = arith.constant 0 : i32
    %c0_i32_1 = arith.constant 0 : i32
    return %arg0, %c0_i32, %c0_i32_0 : i32, i32, i32
  }
  func.func @transform_10(%arg0: i32) -> (i32, i32, i32) {
    %c0_i32 = arith.constant 0 : i32
    %c0_i32_0 = arith.constant 0 : i32
    %c0_i32_1 = arith.constant 0 : i32
    return %arg0, %c0_i32, %c0_i32_0 : i32, i32, i32
  }
}

</mosaic_0001>

<llo_original>
// kernel: tpu_custom_call.1
$region0: #{tpu_custom_call.1}
  #allocation0 [shape = 'u32[]', space=smem, size = 0x4, offset = 0x4, fixed_abs, tag = 'smem constant byte address 0x4 - core index']
  #allocation1 [shape = 'u32[72,128]{1,0:T(1,128)}', space=vmem, size = 0x9000, scoped, tag = 'internal scratch']
  #allocation2 [shape = 'f32[33,34]{1,0:T(8,128)}', space=vmem, size = 0x5000, scoped, tag = 'scratch operand']
  #allocation3 [shape = 'f32[19,4]{1,0:T(8,128)}', space=vmem, size = 0x3000, scoped, tag = 'scratch operand']
  #allocation4 [shape = 'f32[1,1]{1,0:T(1,128)S(1)}', space=vmem, size = 0x200, scoped, tag = 'scoped memory for tpu_custom_call.1']
  %s0 = inlined_call_operand.vmem [shape: bf16[2,32,8], index: 0, kind: input, shape index: {}]
  %s1 = inlined_call_operand.vmem [shape: bf16[4,8,34], index: 1, kind: input, shape index: {}]
  %s2 = inlined_call_operand.vmem [shape: bf16[170,4], index: 2, kind: input, shape index: {}]
  %s3 = inlined_call_operand.vmem [shape: f32[1,4], index: 3, kind: input, shape index: {}]
  %s4 = inlined_call_operand.vmem [shape: bf16[20,8], index: 4, kind: input, shape index: {}]
  %s5 = inlined_call_operand.vmem [shape: f32[1,8], index: 5, kind: input, shape index: {}]
  %s6 = inlined_call_operand.vmem [shape: bf16[8,1], index: 6, kind: input, shape index: {}]
  %s7 = inlined_call_operand.<no memory space> [shape: f32[1,1], index: 7, kind: input, shape index: {}]
  %s8 = inlined_call_operand.hbm [shape: f32[2,4,15], index: 8, kind: output, shape index: {0}]
  %s9 = inlined_call_operand.hbm [shape: f32[2,8,8], index: 9, kind: output, shape index: {1}]
  %s10 = inlined_call_operand.hbm [shape: f32[2,1,8], index: 10, kind: output, shape index: {2}]
  %11 = xla_tuple %s8, %s9, %s10
  %s12 = sld [smem:[#allocation0]]
  $region81: #{tpu_custom_call.1} parent=0
    _
  %s14 = ssub.s32 1, %s12
  %s15 = scalar_select 0, %s14, %s12
  %v16 = vstv %s7
  %17 = vst [vmem:[#allocation4] sm:$0x1] %v16
  $region1: #{tpu_custom_call.1} parent=0
    #allocation5 [shape = 'u8[4096]{0}', space=vmem, size = 0x1000, scoped, tag = 'output window, operand 0']
    #allocation6 [shape = 's32[2]{0}', space=sflag, size = 0x8, scoped, tag = 'scoped memory for tpu_custom_call.1']
    #allocation7 [shape = 'u8[8192]{0}', space=vmem, size = 0x2000, scoped, tag = 'output window, operand 1']
    #allocation8 [shape = 's32[2]{0}', space=sflag, size = 0x8, scoped, tag = 'scoped memory for tpu_custom_call.1']
    #allocation9 [shape = 'u8[1024]{0}', space=vmem, size = 0x400, scoped, tag = 'output window, operand 2']
    %18 = vsyncpa [#allocation6], 0
    %s19 = scalar_lea.sflag [#allocation6], 1
    %20 = vsyncpa %s19, 0
    %21 = vsyncpa [#allocation8], 0
    %s22 = scalar_lea.sflag [#allocation8], 1
    %23 = vsyncpa %s22, 0
    loop: start=0, step=1, limit=4
    $region2: #{tpu_custom_call.1} parent=1 // loop_pre_header
      _
    $region3: #{tpu_custom_call.1} parent=1 // loop_header
      %s25 = sphi 0, %s29
      %p26 = scmp.ge.s32.totalorder %s25, 4
      %s35 = sphi 0, %s37
      %s38 = sphi 0, %s35
      %s39 = sphi 0, %s38
      %s55 = sphi 0, %s39
      %s59 = sphi 0, %s59
      %s61 = sphi 0, %s59
      %s62 = sphi 0, %s61
      %s76 = sphi 0, %s62
      %s80 = sphi 0, %s80
      %s82 = sphi 0, %s80
      %s83 = sphi 0, %s82
      %s97 = sphi 0, %s83
      %s101 = sphi 0, %s101
      %s103 = sphi 0, %s101
      %s104 = sphi 0, %s103
      %s118 = sphi 0, %s104
      %s122 = sphi 0, %s122
      %s124 = sphi 0, %s122
      %s125 = sphi 0, %s124
      %s139 = sphi 0, %s125
      %s143 = sphi 0, %s143
      %s145 = sphi 0, %s143
      %s146 = sphi 0, %s145
      %s160 = sphi 0, %s146
      %s164 = sphi 0, %s164
      %s166 = sphi 0, %s164
      %s167 = sphi 0, %s166
      %s181 = sphi 0, %s167
      %s185 = sphi 0, %s185
      %s187 = sphi 0, %s185
      %s188 = sphi 0, %s187
      %s202 = sphi 0, %s188
      %s208 = sphi 0, %s210
      %s211 = sphi 0, %s208
      %s212 = sphi 0, %s211
      %s228 = sphi 0, %s212
      %s234 = sphi 0, %s236
      %s237 = sphi 0, %s234
      %s238 = sphi 0, %s237
      %s254 = sphi 0, %s238
      %s260 = sphi 0, %s262
      %s263 = sphi 0, %s260
      %s264 = sphi 0, %s263
      %s280 = sphi 0, %s264
    $region4: #{tpu_custom_call.1} parent=1 // loop_header_branch
      %28 = sbr.rel (%p26) target = $region8
    $region5: #{tpu_custom_call.1} parent=1 // loop_body
      %s30 = ssub.s32 %s25, 1
      %s31 = ssub.s32 %s25, 2
      %s32 = sadd.s32 %s25, 1
      %s33 = ssub.s32 %s25, %s32
      %p34 = scmp.eq.s32.totalorder %s33, 0
      %s36 = sadd.s32 %s35, 1
      %s37 = scalar_select %p34, %s35, %s36
      %p40 = pneg %p34
      %p41 = scmp.eq.s32.totalorder %s25, 1
      %p42 = por %p40, %p41
      %p43 = scmp.ne.s32.totalorder %s35, %s38
      %p44 = scmp.eq.s32.totalorder %s25, 0
      %p45 = por %p43, %p44
      %p46 = scmp.ne.s32.totalorder %s35, %s38
      %p47 = scmp.eq.s32.totalorder %s30, 1
      %p48 = por %p46, %p47
      %p49 = scmp.ne.s32.totalorder %s38, %s39
      %p50 = scmp.eq.s32.totalorder %s30, 0
      %p51 = por %p49, %p50
      %p52 = scmp.ne.s32.totalorder %s38, %s39
      %p53 = scmp.eq.s32.totalorder %s31, 1
      %p54 = por %p52, %p53
      %p56 = scmp.ne.s32.totalorder %s39, %s55
      %p57 = scmp.eq.s32.totalorder %s31, 0
      %p58 = por %p56, %p57
      %s60 = sadd.s32 %s59, 1
      %p63 = scmp.eq.s32.totalorder %s25, 1
      %p64 = scmp.ne.s32.totalorder %s59, %s61
      %p65 = scmp.eq.s32.totalorder %s25, 0
      %p66 = por %p64, %p65
      %p67 = scmp.ne.s32.totalorder %s59, %s61
      %p68 = scmp.eq.s32.totalorder %s30, 1
      %p69 = por %p67, %p68
      %p70 = scmp.ne.s32.totalorder %s61, %s62
      %p71 = scmp.eq.s32.totalorder %s30, 0
      %p72 = por %p70, %p71
      %p73 = scmp.ne.s32.totalorder %s61, %s62
      %p74 = scmp.eq.s32.totalorder %s31, 1
      %p75 = por %p73, %p74
      %p77 = scmp.ne.s32.totalorder %s62, %s76
      %p78 = scmp.eq.s32.totalorder %s31, 0
      %p79 = por %p77, %p78
      %s81 = sadd.s32 %s80, 1
      %p84 = scmp.eq.s32.totalorder %s25, 1
      %p85 = scmp.ne.s32.totalorder %s80, %s82
      %p86 = scmp.eq.s32.totalorder %s25, 0
      %p87 = por %p85, %p86
      %p88 = scmp.ne.s32.totalorder %s80, %s82
      %p89 = scmp.eq.s32.totalorder %s30, 1
      %p90 = por %p88, %p89
      %p91 = scmp.ne.s32.totalorder %s82, %s83
      %p92 = scmp.eq.s32.totalorder %s30, 0
      %p93 = por %p91, %p92
      %p94 = scmp.ne.s32.totalorder %s82, %s83
      %p95 = scmp.eq.s32.totalorder %s31, 1
      %p96 = por %p94, %p95
      %p98 = scmp.ne.s32.totalorder %s83, %s97
      %p99 = scmp.eq.s32.totalorder %s31, 0
      %p100 = por %p98, %p99
      %s102 = sadd.s32 %s101, 1
      %p105 = scmp.eq.s32.totalorder %s25, 1
      %p106 = scmp.ne.s32.totalorder %s101, %s103
      %p107 = scmp.eq.s32.totalorder %s25, 0
      %p108 = por %p106, %p107
      %p109 = scmp.ne.s32.totalorder %s101, %s103
      %p110 = scmp.eq.s32.totalorder %s30, 1
      %p111 = por %p109, %p110
      %p112 = scmp.ne.s32.totalorder %s103, %s104
      %p113 = scmp.eq.s32.totalorder %s30, 0
      %p114 = por %p112, %p113
      %p115 = scmp.ne.s32.totalorder %s103, %s104
      %p116 = scmp.eq.s32.totalorder %s31, 1
      %p117 = por %p115, %p116
      %p119 = scmp.ne.s32.totalorder %s104, %s118
      %p120 = scmp.eq.s32.totalorder %s31, 0
      %p121 = por %p119, %p120
      %s123 = sadd.s32 %s122, 1
      %p126 = scmp.eq.s32.totalorder %s25, 1
      %p127 = scmp.ne.s32.totalorder %s122, %s124
      %p128 = scmp.eq.s32.totalorder %s25, 0
      %p129 = por %p127, %p128
      %p130 = scmp.ne.s32.totalorder %s122, %s124
      %p131 = scmp.eq.s32.totalorder %s30, 1
      %p132 = por %p130, %p131
      %p133 = scmp.ne.s32.totalorder %s124, %s125
      %p134 = scmp.eq.s32.totalorder %s30, 0
      %p135 = por %p133, %p134
      %p136 = scmp.ne.s32.totalorder %s124, %s125
      %p137 = scmp.eq.s32.totalorder %s31, 1
      %p138 = por %p136, %p137
      %p140 = scmp.ne.s32.totalorder %s125, %s139
      %p141 = scmp.eq.s32.totalorder %s31, 0
      %p142 = por %p140, %p141
      %s144 = sadd.s32 %s143, 1
      %p147 = scmp.eq.s32.totalorder %s25, 1
      %p148 = scmp.ne.s32.totalorder %s143, %s145
      %p149 = scmp.eq.s32.totalorder %s25, 0
      %p150 = por %p148, %p149
      %p151 = scmp.ne.s32.totalorder %s143, %s145
      %p152 = scmp.eq.s32.totalorder %s30, 1
      %p153 = por %p151, %p152
      %p154 = scmp.ne.s32.totalorder %s145, %s146
      %p155 = scmp.eq.s32.totalorder %s30, 0
      %p156 = por %p154, %p155
      %p157 = scmp.ne.s32.totalorder %s145, %s146
      %p158 = scmp.eq.s32.totalorder %s31, 1
      %p159 = por %p157, %p158
      %p161 = scmp.ne.s32.totalorder %s146, %s160
      %p162 = scmp.eq.s32.totalorder %s31, 0
      %p163 = por %p161, %p162
      %s165 = sadd.s32 %s164, 1
      %p168 = scmp.eq.s32.totalorder %s25, 1
      %p169 = scmp.ne.s32.totalorder %s164, %s166
      %p170 = scmp.eq.s32.totalorder %s25, 0
      %p171 = por %p169, %p170
      %p172 = scmp.ne.s32.totalorder %s164, %s166
      %p173 = scmp.eq.s32.totalorder %s30, 1
      %p174 = por %p172, %p173
      %p175 = scmp.ne.s32.totalorder %s166, %s167
      %p176 = scmp.eq.s32.totalorder %s30, 0
      %p177 = por %p175, %p176
      %p178 = scmp.ne.s32.totalorder %s166, %s167
      %p179 = scmp.eq.s32.totalorder %s31, 1
      %p180 = por %p178, %p179
      %p182 = scmp.ne.s32.totalorder %s167, %s181
      %p183 = scmp.eq.s32.totalorder %s31, 0
      %p184 = por %p182, %p183
      %s186 = sadd.s32 %s185, 1
      %p189 = scmp.eq.s32.totalorder %s25, 1
      %p190 = scmp.ne.s32.totalorder %s185, %s187
      %p191 = scmp.eq.s32.totalorder %s25, 0
      %p192 = por %p190, %p191
      %p193 = scmp.ne.s32.totalorder %s185, %s187
      %p194 = scmp.eq.s32.totalorder %s30, 1
      %p195 = por %p193, %p194
      %p196 = scmp.ne.s32.totalorder %s187, %s188
      %p197 = scmp.eq.s32.totalorder %s30, 0
      %p198 = por %p196, %p197
      %p199 = scmp.ne.s32.totalorder %s187, %s188
      %p200 = scmp.eq.s32.totalorder %s31, 1
      %p201 = por %p199, %p200
      %p203 = scmp.ne.s32.totalorder %s188, %s202
      %p204 = scmp.eq.s32.totalorder %s31, 0
      %p205 = por %p203, %p204
      %s206 = ssub.s32 %s25, %s32
      %p207 = scmp.eq.s32.totalorder %s206, 0
      %s209 = sadd.s32 %s208, 1
      %s210 = scalar_select %p207, %s208, %s209
      %p213 = pneg %p207
      %p214 = scmp.eq.s32.totalorder %s25, 1
      %p215 = por %p213, %p214
      %p216 = scmp.ne.s32.totalorder %s208, %s211
      %p217 = scmp.eq.s32.totalorder %s25, 0
      %p218 = por %p216, %p217
      %p219 = scmp.ne.s32.totalorder %s208, %s211
      %p220 = scmp.eq.s32.totalorder %s30, 1
      %p221 = por %p219, %p220
      %p222 = scmp.ne.s32.totalorder %s211, %s212
      %p223 = scmp.eq.s32.totalorder %s30, 0
      %p224 = por %p222, %p223
      %p225 = scmp.ne.s32.totalorder %s211, %s212
      %p226 = scmp.eq.s32.totalorder %s31, 1
      %p227 = por %p225, %p226
      %p229 = scmp.ne.s32.totalorder %s212, %s228
      %p230 = scmp.eq.s32.totalorder %s31, 0
      %p231 = por %p229, %p230
      %s232 = ssub.s32 %s25, %s32
      %p233 = scmp.eq.s32.totalorder %s232, 0
      %s235 = sadd.s32 %s234, 1
      %s236 = scalar_select %p233, %s234, %s235
      %p239 = pneg %p233
      %p240 = scmp.eq.s32.totalorder %s25, 1
      %p241 = por %p239, %p240
      %p242 = scmp.ne.s32.totalorder %s234, %s237
      %p243 = scmp.eq.s32.totalorder %s25, 0
      %p244 = por %p242, %p243
      %p245 = scmp.ne.s32.totalorder %s234, %s237
      %p246 = scmp.eq.s32.totalorder %s30, 1
      %p247 = por %p245, %p246
      %p248 = scmp.ne.s32.totalorder %s237, %s238
      %p249 = scmp.eq.s32.totalorder %s30, 0
      %p250 = por %p248, %p249
      %p251 = scmp.ne.s32.totalorder %s237, %s238
      %p252 = scmp.eq.s32.totalorder %s31, 1
      %p253 = por %p251, %p252
      %p255 = scmp.ne.s32.totalorder %s238, %s254
      %p256 = scmp.eq.s32.totalorder %s31, 0
      %p257 = por %p255, %p256
      %s258 = ssub.s32 %s25, %s32
      %p259 = scmp.eq.s32.totalorder %s258, 0
      %s261 = sadd.s32 %s260, 1
      %s262 = scalar_select %p259, %s260, %s261
      %p265 = pneg %p259
      %p266 = scmp.eq.s32.totalorder %s25, 1
      %p267 = por %p265, %p266
      %p268 = scmp.ne.s32.totalorder %s260, %s263
      %p269 = scmp.eq.s32.totalorder %s25, 0
      %p270 = por %p268, %p269
      %p271 = scmp.ne.s32.totalorder %s260, %s263
      %p272 = scmp.eq.s32.totalorder %s30, 1
      %p273 = por %p271, %p272
      %p274 = scmp.ne.s32.totalorder %s263, %s264
      %p275 = scmp.eq.s32.totalorder %s30, 0
      %p276 = por %p274, %p275
      %p277 = scmp.ne.s32.totalorder %s263, %s264
      %p278 = scmp.eq.s32.totalorder %s31, 1
      %p279 = por %p277, %p278
      %p281 = scmp.ne.s32.totalorder %s264, %s280
      %p282 = scmp.eq.s32.totalorder %s31, 0
      %p283 = por %p281, %p282
      %p284 = scmp.le.s32.totalorder 1, %s25
      %p285 = scmp.lt.s32.totalorder %s25, 3
      %p286 = pnand %p284, %p285
      %p287 = pneg %p286
      // Predicated region
      $region9: #{tpu_custom_call.1} parent=5 // pred_check
        _
      $region10: #{tpu_custom_call.1} parent=5 // pred_check_branch
        %289 = sbr.rel (%p286) target = $region12
      $region11: #{tpu_custom_call.1} parent=5 // pred_region
        %s290 = ssub.s32 %s25, 1
        // Predicated region
        $region13: #{tpu_custom_call.1} parent=11 // pred_check
          %p291 = pneg %p72
        $region14: #{tpu_custom_call.1} parent=11 // pred_check_branch
          %293 = sbr.rel (%p291) target = $region16
        $region15: #{tpu_custom_call.1} parent=11 // pred_region
          _
        $region16: #{tpu_custom_call.1} parent=11 // pred_fallthru
          _
        // Predicated region
        $region17: #{tpu_custom_call.1} parent=11 // pred_check
          %p294 = pneg %p93
        $region18: #{tpu_custom_call.1} parent=11 // pred_check_branch
          %296 = sbr.rel (%p294) target = $region20
        $region19: #{tpu_custom_call.1} parent=11 // pred_region
          _
        $region20: #{tpu_custom_call.1} parent=11 // pred_fallthru
          _
        // Predicated region
        $region21: #{tpu_custom_call.1} parent=11 // pred_check
          %p297 = pneg %p114
        $region22: #{tpu_custom_call.1} parent=11 // pred_check_branch
          %299 = sbr.rel (%p297) target = $region24
        $region23: #{tpu_custom_call.1} parent=11 // pred_region
          _
        $region24: #{tpu_custom_call.1} parent=11 // pred_fallthru
          _
        // Predicated region
        $region25: #{tpu_custom_call.1} parent=11 // pred_check
          %p300 = pneg %p135
        $region26: #{tpu_custom_call.1} parent=11 // pred_check_branch
          %302 = sbr.rel (%p300) target = $region28
        $region27: #{tpu_custom_call.1} parent=11 // pred_region
          _
        $region28: #{tpu_custom_call.1} parent=11 // pred_fallthru
          _
        // Predicated region
        $region29: #{tpu_custom_call.1} parent=11 // pred_check
          %p303 = pneg %p156
        $region30: #{tpu_custom_call.1} parent=11 // pred_check_branch
          %305 = sbr.rel (%p303) target = $region32
        $region31: #{tpu_custom_call.1} parent=11 // pred_region
          _
        $region32: #{tpu_custom_call.1} parent=11 // pred_fallthru
          _
        // Predicated region
        $region33: #{tpu_custom_call.1} parent=11 // pred_check
          %p306 = pneg %p177
        $region34: #{tpu_custom_call.1} parent=11 // pred_check_branch
          %308 = sbr.rel (%p306) target = $region36
        $region35: #{tpu_custom_call.1} parent=11 // pred_region
          _
        $region36: #{tpu_custom_call.1} parent=11 // pred_fallthru
          _
        // Predicated region
        $region37: #{tpu_custom_call.1} parent=11 // pred_check
          %p309 = pneg %p198
        $region38: #{tpu_custom_call.1} parent=11 // pred_check_branch
          %311 = sbr.rel (%p309) target = $region40
        $region39: #{tpu_custom_call.1} parent=11 // pred_region
          _
        $region40: #{tpu_custom_call.1} parent=11 // pred_fallthru
          _
      $region12: #{tpu_custom_call.1} parent=5 // pred_fallthru
        _
      %p312 = scmp.lt.s32.totalorder %s25, 2
      // Predicated region
      $region41: #{tpu_custom_call.1} parent=5 // pred_check
        %p313 = pneg %p312
      $region42: #{tpu_custom_call.1} parent=5 // pred_check_branch
        %315 = sbr.rel (%p313) target = $region44
      $region43: #{tpu_custom_call.1} parent=5 // pred_region
        // Predicated region
        $region45: #{tpu_custom_call.1} parent=43 // pred_check
          %p316 = pneg %p45
        $region46: #{tpu_custom_call.1} parent=43 // pred_check_branch
          %318 = sbr.rel (%p316) target = $region48
        $region47: #{tpu_custom_call.1} parent=43 // pred_region
          %p319 = scmp.lt.s32.totalorder %s25, 1
          %s320 = scalar_select %p319, %s25, 1
          %s321 = smul.addr %s320, 4
          %s322 = smul.addr %s321, 4
          %s323 = scalar_lea.vmem %s0, %s322
        $region48: #{tpu_custom_call.1} parent=43 // pred_fallthru
          _
      $region44: #{tpu_custom_call.1} parent=5 // pred_fallthru
        _
      %p324 = scmp.le.s32.totalorder 1, %s25
      %p325 = scmp.lt.s32.totalorder %s25, 3
      %p326 = pnand %p324, %p325
      %p327 = pneg %p326
      // Predicated region
      $region49: #{tpu_custom_call.1} parent=5 // pred_check
        _
      $region50: #{tpu_custom_call.1} parent=5 // pred_check_branch
        %329 = sbr.rel (%p326) target = $region52
      $region51: #{tpu_custom_call.1} parent=5 // pred_region
        %s330 = ssub.s32 %s25, 1
        %p331 = scmp.lt.s32.totalorder %s30, 1
        %s332 = scalar_select %p331, %s30, 1
        %s333 = smul.addr %s332, 4
        %s334 = smul.addr %s333, 4
        %s335 = scalar_lea.vmem %s0, %s334
        %p336 = pneg %p51
        %p337 = pneg %p48
        %p338 = pneg %p72
        %p339 = pneg %p69
        %p340 = pneg %p93
        %p341 = pneg %p90
        %p342 = pneg %p114
        %p343 = pneg %p111
        %p344 = pneg %p135
        %p345 = pneg %p132
        %p346 = pneg %p156
        %p347 = pneg %p153
        %p348 = pneg %p177
        %p349 = pneg %p174
        %p350 = pneg %p198
        %p351 = pneg %p195
        %p352 = pneg %p224
        %p353 = pneg %p221
        %s354 = sand.u32 %s211, 1
        %s355 = scalar_lea.sflag [#allocation6], %s354
        %s356 = sand.u32 %s211, 1
        %s357 = smul.addr %s356, 4
        %s358 = scalar_lea.vmem [#allocation5], %s357
        %p359 = pneg %p250
        %p360 = pneg %p247
        %s361 = sand.u32 %s30, 1
        %s362 = scalar_lea.sflag [#allocation8], %s361
        %s363 = sand.u32 %s237, 1
        %s364 = smul.addr %s363, 8
        %s365 = scalar_lea.vmem [#allocation7], %s364
        %p366 = pneg %p276
        %p367 = pneg %p273
        %s368 = sand.u32 %s30, 1
        %s369 = scalar_lea.sflag [#allocation8], %s368
        %s370 = sand.u32 %s263, 1
        %s371 = scalar_lea.vmem [#allocation9], %s370
        %p372 = scmp.lt.s32.totalorder %s30, 1
        %s373 = scalar_select %p372, %s30, 1
        %s374 = smul.addr %s373, 4
        %s375 = smul.addr %s374, 4
        %s376 = scalar_lea.vmem %s0, %s375
        %vm378 = vcmask 271360
        %379 = vst.msk [vmem:[#allocation2] sm:$0x3] %vm378, 0.0
        %380 = vst.msk [vmem:[#allocation2 + $0x1f] sm:$0x3] %vm378, 0.0
        %vm381 = vcmask 25600
        %382 = vst.msk [vmem:[#allocation3] sm:$0x3] %vm381, 0.0
        %383 = vst.msk [vmem:[#allocation3 + $0x11] sm:$0x3] %vm381, 0.0
        %v384 = vld [vmem:[%s376] sm:$0xf]
        %v385 = vld [vmem:[%s376 + $0x4] sm:$0xf]
        %v386 = vld [vmem:[%s376 + $0x8] sm:$0xf]
        %v387 = vld [vmem:[%s376 + $0xc] sm:$0x7]
        %v388 = vld [vmem:[%s1] sm:$0xf]
        %s389 = scalar_lea.vmem %s1, 4
        %v390 = vld [vmem:[%s389] sm:$0xf]
        %v395 = vunpack.c.l.b16 %v384
        %v396 = vunpack.c.l.b16 %v385
        %v397 = vunpack.c.l.b16 %v386
        %v398 = vunpack.c.l.b16 %v387
        %v399 = vpack.c.b16 %v396, %v395
        %v400 = vpack.c.b16 %v398, %v397
        %vm401 = vsmask.f32 7424
        %v403 = vshrl.u32 %v399, 16
        %v405 = vshll.u32 %v399, 16
        %v407 = vrot.slane %v405, 1
        %v408 = vor.u32 %v403, %v407
        %v410 = vshll.u32 %v400, 16
        %v412 = vrot.slane %v410, 1
        %v413 = vsel %vm401, %v408, %v412
        %v414 = vshrl.u32 %v400, 16
        %v416 = vor.u32 %v414, %v412
        %vm417 = vcmask 64512
        %v419 = vsel %vm417, %v413, 0
        %v422 = vsel %vm417, %v416, 0
        %vm424 = vcmask 1043456
        %v426 = vsel %vm424, %v390, 0
        %428 = vmatpush.bf16.msra.mxu0 0
        %429 = vmatpush.bf16.msra.mxu0 0
        %430 = vmatpush.bf16.msra.mxu0 0
        %431 = vmatpush.bf16.msra.mxu0 0
        %432 = vmatpush.bf16.msra.mxu0 0
        %433 = vmatpush.bf16.msra.mxu0 0
        %434 = vmatpush.bf16.msra.mxu0 0
        %435 = vmatpush.bf16.msra.mxu0 %v426
        %436 = vmatmul.bf16.gmra.mxu0 %v419
        %v437 = vpop.f32.mrf.mxu0
        %v438 = vadd.f32 0.0, %v437
        %v439 = vpop.f32.mrf.mxu0
        %v440 = vadd.f32 0.0, %v439
        %441 = vmatmul.bf16.gmra.mxu0 %v422
        %v442 = vpop.f32.mrf.mxu0
        %v443 = vadd.f32 0.0, %v442
        %v444 = vpop.f32.mrf.mxu0
        %v445 = vadd.f32 0.0, %v444
        %446 = vdwg.mxu0
        %v447 = vsel %vm417, %v399, 0
        %v449 = vsel %vm417, %v400, 0
        %v452 = vsel %vm424, %v388, 0
        %454 = vmatpush.bf16.msra.mxu0 0
        %455 = vmatpush.bf16.msra.mxu0 0
        %456 = vmatpush.bf16.msra.mxu0 0
        %457 = vmatpush.bf16.msra.mxu0 0
        %458 = vmatpush.bf16.msra.mxu0 0
        %459 = vmatpush.bf16.msra.mxu0 0
        %460 = vmatpush.bf16.msra.mxu0 0
        %461 = vmatpush.bf16.msra.mxu0 %v452
        %462 = vmatmul.bf16.gmra.mxu0 %v447
        %v463 = vpop.f32.mrf.mxu0
        %v464 = vadd.f32 %v438, %v463
        %v465 = vpop.f32.mrf.mxu0
        %v466 = vadd.f32 %v440, %v465
        %467 = vmatmul.bf16.gmra.mxu0 %v449
        %v468 = vpop.f32.mrf.mxu0
        %v469 = vadd.f32 %v443, %v468
        %v470 = vpop.f32.mrf.mxu0
        %v471 = vadd.f32 %v445, %v470
        %472 = vdwg.mxu0
        %v473 = vld [vmem:[%s376] sm:$0xe]
        %v474 = vld [vmem:[%s376 + $0xc] sm:$0xf]
        %s475 = scalar_lea.vmem %s1, 8
        %v476 = vld [vmem:[%s475] sm:$0xf]
        %v479 = vunpack.c.l.b16 %v473
        %v480 = vunpack.c.l.b16 %v474
        %v481 = vpack.c.b16 %v396, %v479
        %v482 = vpack.c.b16 %v480, %v397
        %vm483 = vcmask 1046528
        %v484 = vrot.slane %v481, 1
        %v485 = vrot.slane %v482, 1
        %v486 = vsel %vm483, %v484, %v485
        %v488 = vsel %vm417, %v486, 0
        %v491 = vsel %vm417, %v485, 0
        %v494 = vsel %vm424, %v476, 0
        %496 = vmatpush.bf16.msra.mxu0 0
        %497 = vmatpush.bf16.msra.mxu0 0
        %498 = vmatpush.bf16.msra.mxu0 0
        %499 = vmatpush.bf16.msra.mxu0 0
        %500 = vmatpush.bf16.msra.mxu0 0
        %501 = vmatpush.bf16.msra.mxu0 0
        %502 = vmatpush.bf16.msra.mxu0 0
        %503 = vmatpush.bf16.msra.mxu0 %v494
        %504 = vmatmul.bf16.gmra.mxu0 %v488
        %v505 = vpop.f32.mrf.mxu0
        %v506 = vadd.f32 0.0, %v505
        %v507 = vpop.f32.mrf.mxu0
        %v508 = vadd.f32 0.0, %v507
        %509 = vmatmul.bf16.gmra.mxu0 %v491
        %v510 = vpop.f32.mrf.mxu0
        %v511 = vadd.f32 0.0, %v510
        %v512 = vpop.f32.mrf.mxu0
        %v513 = vadd.f32 0.0, %v512
        %514 = vdwg.mxu0
        %v515 = vadd.f32 %v464, %v506
        %v516 = vadd.f32 %v466, %v508
        %v517 = vadd.f32 %v469, %v511
        %v518 = vadd.f32 %v471, %v513
        %s519 = scalar_lea.vmem %s1, 12
        %v520 = vld [vmem:[%s519] sm:$0xf]
        %vm521 = vsmask.f32 6400
        %v523 = vshrl.u32 %v481, 16
        %v525 = vrot.slane %v523, 1
        %v526 = vshll.u32 %v481, 16
        %v528 = vrot.slane %v526, 2
        %v529 = vor.u32 %v525, %v528
        %v531 = vshrl.u32 %v482, 16
        %v533 = vrot.slane %v531, 1
        %v534 = vshll.u32 %v482, 16
        %v536 = vrot.slane %v534, 2
        %v537 = vor.u32 %v533, %v536
        %v538 = vsel %vm521, %v529, %v537
        %v540 = vsel %vm417, %v538, 0
        %v543 = vsel %vm417, %v537, 0
        %v546 = vsel %vm424, %v520, 0
        %548 = vmatpush.bf16.msra.mxu0 0
        %549 = vmatpush.bf16.msra.mxu0 0
        %550 = vmatpush.bf16.msra.mxu0 0
        %551 = vmatpush.bf16.msra.mxu0 0
        %552 = vmatpush.bf16.msra.mxu0 0
        %553 = vmatpush.bf16.msra.mxu0 0
        %554 = vmatpush.bf16.msra.mxu0 0
        %555 = vmatpush.bf16.msra.mxu0 %v546
        %556 = vmatmul.bf16.gmra.mxu0 %v540
        %v557 = vpop.f32.mrf.mxu0
        %v558 = vadd.f32 0.0, %v557
        %v559 = vpop.f32.mrf.mxu0
        %v560 = vadd.f32 0.0, %v559
        %561 = vmatmul.bf16.gmra.mxu0 %v543
        %v562 = vpop.f32.mrf.mxu0
        %v563 = vadd.f32 0.0, %v562
        %v564 = vpop.f32.mrf.mxu0
        %v565 = vadd.f32 0.0, %v564
        %566 = vdwg.mxu0
        %v567 = vadd.f32 %v515, %v558
        %v568 = vadd.f32 %v516, %v560
        %v569 = vadd.f32 %v517, %v563
        %v570 = vadd.f32 %v518, %v565
        %vm571 = vcmask 277504
        %572 = vst.msk [vmem:[#allocation2 + $0x2] sm:$0xff] %vm571, %v567
        %573 = vst.msk [vmem:[#allocation2 + $0xa] sm:$0xff] %vm571, %v568
        %574 = vst.msk [vmem:[#allocation2 + $0x12] sm:$0xff] %vm571, %v569
        %vm575 = vcmask 274432
        %576 = vst.msk [vmem:[#allocation2 + $0x1a] sm:$0x1f] %vm575, %v570
        %v577 = vld [vmem:[#allocation2] ss:$2 sm:$0xff]
        %s578 = scalar_lea.vmem [#allocation2], 16
        %v579 = vld [vmem:[%s578] ss:$2 sm:$0x7f]
        %s580 = scalar_lea.vmem [#allocation2], 1
        %v581 = vld [vmem:[%s580] ss:$2 sm:$0xff]
        %s582 = scalar_lea.vmem [#allocation2], 17
        %v583 = vld [vmem:[%s582] ss:$2 sm:$0x7f]
        %s584 = scalar_lea.vmem [#allocation2], 2
        %v585 = vld [vmem:[%s584] ss:$2 sm:$0xff]
        %s586 = scalar_lea.vmem [#allocation2], 18
        %v587 = vld [vmem:[%s586] ss:$2 sm:$0x7f]
        %s588 = scalar_lea.vmem [#allocation2], 3
        %v589 = vld [vmem:[%s588] ss:$2 sm:$0xff]
        %s590 = scalar_lea.vmem [#allocation2], 19
        %v591 = vld [vmem:[%s590] ss:$2 sm:$0x7f]
        %s592 = scalar_lea.vmem [#allocation2], 4
        %v593 = vld [vmem:[%s592] ss:$2 sm:$0xff]
        %s594 = scalar_lea.vmem [#allocation2], 20
        %v595 = vld [vmem:[%s594] ss:$2 sm:$0x7f]
        %598 = vrot.lane.b32.xlu0 %v581, 34
        %v599 = vpop.permute.xlu0 %598
        %600 = vrot.lane.b32.xlu0 %v583, 34
        %v601 = vpop.permute.xlu0 %600
        %606 = vrot.lane.b32.xlu0 %v585, 68
        %v607 = vpop.permute.xlu0 %606
        %608 = vrot.lane.b32.xlu0 %v587, 68
        %v609 = vpop.permute.xlu0 %608
        %614 = vrot.lane.b32.xlu0 %v589, 102
        %v615 = vpop.permute.xlu0 %614
        %616 = vrot.lane.b32.xlu0 %v591, 102
        %v617 = vpop.permute.xlu0 %616
        %622 = vrot.lane.b32.xlu0 %v593, 8
        %v623 = vpop.permute.xlu0 %622
        %624 = vrot.lane.b32.xlu0 %v595, 8
        %v625 = vpop.permute.xlu0 %624
        %v628 = vsel %vm571, %v577, %v599
        %v629 = vsel %vm571, %v579, %v601
        %vm630 = vcmask 556032
        %v631 = vsel %vm630, %v628, %v607
        %v632 = vsel %vm630, %v629, %v609
        %vm633 = vcmask 834560
        %v634 = vsel %vm633, %v631, %v615
        %v635 = vsel %vm633, %v632, %v617
        %v636 = vsel %vm417, %v615, %v623
        %v637 = vsel %vm417, %v617, %v625
        %v638 = vpack.c.bf16 %v635, %v634
        %v639 = vpack.c.bf16 %v637, %v636
        %v640 = vld [vmem:[%s2] sm:$0xf]
        %v641 = vld [vmem:[%s2 + $0x4] sm:$0xf]
        %v642 = vld [vmem:[%s2 + $0x8] sm:$0xf]
        %v643 = vld [vmem:[%s2 + $0xc] sm:$0xf]
        %v644 = vld [vmem:[%s2 + $0x10] sm:$0xf]
        %v645 = vld [vmem:[%s2 + $0x14] sm:$0xf]
        %v646 = vld [vmem:[%s2 + $0x18] sm:$0xf]
        %v647 = vld [vmem:[%s2 + $0x1c] sm:$0xf]
        %v648 = vld [vmem:[%s2 + $0x20] sm:$0xf]
        %v649 = vld [vmem:[%s2 + $0x24] sm:$0xf]
        %v650 = vld [vmem:[%s2 + $0x28] sm:$0xf]
        %v651 = vld [vmem:[%s2 + $0x2c] sm:$0xf]
        %v652 = vld [vmem:[%s2 + $0x30] sm:$0xf]
        %v653 = vld [vmem:[%s2 + $0x34] sm:$0xf]
        %v654 = vld [vmem:[%s2 + $0x38] sm:$0xf]
        %v655 = vld [vmem:[%s2 + $0x3c] sm:$0xf]
        %v656 = vld [vmem:[%s2 + $0x40] sm:$0xf]
        %v657 = vld [vmem:[%s2 + $0x44] sm:$0xf]
        %v658 = vld [vmem:[%s2 + $0x48] sm:$0xf]
        %v659 = vld [vmem:[%s2 + $0x4c] sm:$0xf]
        %v660 = vld [vmem:[%s2 + $0x50] sm:$0xf]
        %v661 = vld [vmem:[%s2 + $0x54] sm:$0x1]
        %v662 = vld [vmem:[%s3] sm:$0x1]
        %v664 = vperm.slane %v662, 0
        %v688 = vunpack.c.l.b16 %v640
        %v689 = vunpack.c.l.b16 %v641
        %v690 = vunpack.c.l.b16 %v642
        %v691 = vunpack.c.l.b16 %v643
        %v692 = vunpack.c.l.b16 %v644
        %v693 = vunpack.c.l.b16 %v645
        %v694 = vunpack.c.l.b16 %v646
        %v695 = vunpack.c.l.b16 %v647
        %v696 = vunpack.c.l.b16 %v648
        %v697 = vunpack.c.l.b16 %v649
        %v698 = vunpack.c.l.b16 %v650
        %v699 = vunpack.c.l.b16 %v651
        %v700 = vunpack.c.l.b16 %v652
        %v701 = vunpack.c.l.b16 %v653
        %v702 = vunpack.c.l.b16 %v654
        %v703 = vunpack.c.l.b16 %v655
        %v704 = vunpack.c.l.b16 %v656
        %v705 = vunpack.c.l.b16 %v657
        %v706 = vunpack.c.l.b16 %v658
        %v707 = vunpack.c.l.b16 %v659
        %v708 = vunpack.c.l.b16 %v660
        %v709 = vunpack.c.l.b16 %v661
        %v710 = vpack.c.b16 %v689, %v688
        %v711 = vpack.c.b16 %v691, %v690
        %v712 = vpack.c.b16 %v693, %v692
        %v713 = vpack.c.b16 %v695, %v694
        %v714 = vpack.c.b16 %v697, %v696
        %v715 = vpack.c.b16 %v699, %v698
        %v716 = vpack.c.b16 %v701, %v700
        %v717 = vpack.c.b16 %v703, %v702
        %v718 = vpack.c.b16 %v705, %v704
        %v719 = vpack.c.b16 %v707, %v706
        %v720 = vpack.c.b16 %v709, %v708
        %vm731 = vcmask 343040
        %v733 = vsel %vm731, %v639, 0
        %vm735 = vcmask 1044480
        %v737 = vsel %vm735, %v720, 0
        %739 = vmatpush.bf16.msra.mxu0 %v717
        %740 = vmatpush.bf16.msra.mxu0 %v716
        %741 = vmatpush.bf16.msra.mxu0 %v715
        %742 = vmatpush.bf16.msra.mxu0 %v714
        %743 = vmatpush.bf16.msra.mxu0 %v713
        %744 = vmatpush.bf16.msra.mxu0 %v712
        %745 = vmatpush.bf16.msra.mxu0 %v711
        %746 = vmatpush.bf16.msra.mxu0 %v710
        %747 = vmatmul.bf16.gmra.mxu0 %v638
        %v748 = vpop.f32.mrf.mxu0
        %v749 = vadd.f32 %v664, %v748
        %v750 = vpop.f32.mrf.mxu0
        %v751 = vadd.f32 %v664, %v750
        %752 = vdwg.mxu0
        %753 = vmatpush.bf16.msra.mxu0 0
        %754 = vmatpush.bf16.msra.mxu0 0
        %755 = vmatpush.bf16.msra.mxu0 0
        %756 = vmatpush.bf16.msra.mxu0 0
        %757 = vmatpush.bf16.msra.mxu0 0
        %758 = vmatpush.bf16.msra.mxu0 %v737
        %759 = vmatpush.bf16.msra.mxu0 %v719
        %760 = vmatpush.bf16.msra.mxu0 %v718
        %761 = vmatmul.bf16.gmra.mxu0 %v733
        %v762 = vpop.f32.mrf.mxu0
        %v763 = vadd.f32 %v749, %v762
        %v764 = vpop.f32.mrf.mxu0
        %v765 = vadd.f32 %v751, %v764
        %766 = vdwg.mxu0
        %767 = vxpose.xlu0.b32.start [1/16] %v763, 128
        %768 = vxpose.xlu0.b32.cont [2/16] %v765, 128
        %769 = vxpose.xlu0.b32.cont [3/16] 0.0, 128
        %770 = vxpose.xlu0.b32.cont [4/16] 0.0, 128
        %771 = vxpose.xlu0.b32.cont [5/16] 0.0, 128
        %772 = vxpose.xlu0.b32.cont [6/16] 0.0, 128
        %773 = vxpose.xlu0.b32.cont [7/16] 0.0, 128
        %774 = vxpose.xlu0.b32.cont [8/16] 0.0, 128
        %775 = vxpose.xlu0.b32.cont [9/16] 0.0, 128
        %776 = vxpose.xlu0.b32.cont [10/16] 0.0, 128
        %777 = vxpose.xlu0.b32.cont [11/16] 0.0, 128
        %778 = vxpose.xlu0.b32.cont [12/16] 0.0, 128
        %779 = vxpose.xlu0.b32.cont [13/16] 0.0, 128
        %780 = vxpose.xlu0.b32.cont [14/16] 0.0, 128
        %781 = vxpose.xlu0.b32.cont [15/16] 0.0, 128
        %782 = vxpose.xlu0.b32.end [16/16] 0.0, 128
        %v783 = vpop.trf.xlu0
        %v784 = vpop.trf.xlu0
        %v785 = vpop.trf.xlu0
        %v786 = vpop.trf.xlu0
        %v787 = vpop.trf.xlu0
        %v788 = vpop.trf.xlu0
        %v789 = vpop.trf.xlu0
        %v790 = vpop.trf.xlu0
        %v791 = vpop.trf.xlu0
        %v792 = vpop.trf.xlu0
        %v793 = vpop.trf.xlu0
        %v794 = vpop.trf.xlu0
        %v795 = vpop.trf.xlu0
        %v796 = vpop.trf.xlu0
        %v797 = vpop.trf.xlu0
        %v798 = vpop.trf.xlu0
        %vm799 = vcmask 117760
        %800 = vst.msk [vmem:[%s358] sm:$0xf] %vm799, %v783
        %vm801 = vcmp.ge.f32.partialorder %v763, 0.0
        %vm802 = vcmp.ge.f32.partialorder %v765, 0.0
        %v803 = vmul.f32 %v763, 0.2
        %v804 = vmul.f32 %v765, 0.2
        %v805 = vsel %vm801, %v763, %v803
        %v806 = vsel %vm802, %v765, %v804
        %vm807 = vcmask 31744
        %808 = vst.msk [vmem:[#allocation3 + $0x2] sm:$0xff] %vm807, %v805
        %vm809 = vcmask 30720
        %810 = vst.msk [vmem:[#allocation3 + $0xa] sm:$0x7f] %vm809, %v806
        %v811 = vld [vmem:[#allocation3] ss:$2 sm:$0xff]
        %s812 = scalar_lea.vmem [#allocation3], 1
        %v813 = vld [vmem:[%s812] ss:$2 sm:$0xff]
        %s814 = scalar_lea.vmem [#allocation3], 2
        %v815 = vld [vmem:[%s814] ss:$2 sm:$0xff]
        %s816 = scalar_lea.vmem [#allocation3], 3
        %v817 = vld [vmem:[%s816] ss:$2 sm:$0xff]
        %s818 = scalar_lea.vmem [#allocation3], 4
        %v819 = vld [vmem:[%s818] ss:$2 sm:$0xff]
        %821 = vrot.lane.b32.xlu0 %v813, 4
        %v822 = vpop.permute.xlu0 %821
        %825 = vrot.lane.b32.xlu0 %v815, 8
        %v826 = vpop.permute.xlu0 %825
        %829 = vrot.lane.b32.xlu0 %v817, 12
        %v830 = vpop.permute.xlu0 %829
        %833 = vrot.lane.b32.xlu0 %v819, 16
        %v834 = vpop.permute.xlu0 %833
        %v836 = vsel %vm807, %v811, %v822
        %v837 = vsel %vm417, %v836, %v826
        %vm838 = vcmask 97280
        %v839 = vsel %vm838, %v837, %v830
        %vm840 = vcmask 130048
        %v841 = vsel %vm840, %v839, %v834
        %v842 = vpack.c.bf16 %v841, %v841
        %v843 = vld [vmem:[%s4] sm:$0xf]
        %v844 = vld [vmem:[%s4 + $0x4] sm:$0xf]
        %v845 = vld [vmem:[%s4 + $0x8] sm:$0x3]
        %v846 = vld [vmem:[%s5] sm:$0x1]
        %v848 = vperm.slane %v846, 0
        %v853 = vunpack.c.l.b16 %v843
        %v854 = vunpack.c.l.b16 %v844
        %v855 = vunpack.c.l.b16 %v845
        %v856 = vpack.c.b16 %v854, %v853
        %v857 = vpack.c.b16 %v855, %v855
        %vm859 = vcmask 162816
        %v861 = vsel %vm859, %v842, 0
        %vm863 = vcmask 1041408
        %v865 = vsel %vm863, %v857, 0
        %867 = vmatpush.bf16.msra.mxu0 0
        %868 = vmatpush.bf16.msra.mxu0 0
        %869 = vmatpush.bf16.msra.mxu0 0
        %870 = vmatpush.bf16.msra.mxu0 0
        %871 = vmatpush.bf16.msra.mxu0 0
        %872 = vmatpush.bf16.msra.mxu0 0
        %873 = vmatpush.bf16.msra.mxu0 %v865
        %874 = vmatpush.bf16.msra.mxu0 %v856
        %875 = vmatmul.bf16.gmra.mxu0 %v861
        %v876 = vpop.f32.mrf.mxu0
        %v877 = vadd.f32 %v848, %v876
        %v878 = vpop.f32.mrf.mxu0
        %879 = vdwg.mxu0
        %880 = vxpose.xlu0.b32.start [1/16] %v877, 128
        %881 = vxpose.xlu0.b32.cont [2/16] 0.0, 128
        %882 = vxpose.xlu0.b32.cont [3/16] 0.0, 128
        %883 = vxpose.xlu0.b32.cont [4/16] 0.0, 128
        %884 = vxpose.xlu0.b32.cont [5/16] 0.0, 128
        %885 = vxpose.xlu0.b32.cont [6/16] 0.0, 128
        %886 = vxpose.xlu0.b32.cont [7/16] 0.0, 128
        %887 = vxpose.xlu0.b32.cont [8/16] 0.0, 128
        %888 = vxpose.xlu0.b32.cont [9/16] 0.0, 128
        %889 = vxpose.xlu0.b32.cont [10/16] 0.0, 128
        %890 = vxpose.xlu0.b32.cont [11/16] 0.0, 128
        %891 = vxpose.xlu0.b32.cont [12/16] 0.0, 128
        %892 = vxpose.xlu0.b32.cont [13/16] 0.0, 128
        %893 = vxpose.xlu0.b32.cont [14/16] 0.0, 128
        %894 = vxpose.xlu0.b32.cont [15/16] 0.0, 128
        %895 = vxpose.xlu0.b32.end [16/16] 0.0, 128
        %v896 = vpop.trf.xlu0
        %v897 = vpop.trf.xlu0
        %v898 = vpop.trf.xlu0
        %v899 = vpop.trf.xlu0
        %v900 = vpop.trf.xlu0
        %v901 = vpop.trf.xlu0
        %v902 = vpop.trf.xlu0
        %v903 = vpop.trf.xlu0
        %v904 = vpop.trf.xlu0
        %v905 = vpop.trf.xlu0
        %v906 = vpop.trf.xlu0
        %v907 = vpop.trf.xlu0
        %v908 = vpop.trf.xlu0
        %v909 = vpop.trf.xlu0
        %v910 = vpop.trf.xlu0
        %v911 = vpop.trf.xlu0
        %912 = vst.msk [vmem:[%s365] sm:$0xff] %vm417, %v896
        %vm913 = vcmp.ge.f32.partialorder %v877, 0.0
        %v914 = vmul.f32 %v877, 0.2
        %v915 = vsel %vm913, %v877, %v914
        %v916 = vpack.c.bf16 %v915, %v915
        %v917 = vld [vmem:[%s6] sm:$0xf]
        %v918 = vld [vmem:[#allocation4] sm:$0x1]
        %v920 = vperm.slane %v918, 0
        %v923 = vsel %vm417, %v916, 0
        %v926 = vsel %vm424, %v917, 0
        %928 = vmatpush.bf16.msra.mxu0 0
        %929 = vmatpush.bf16.msra.mxu0 0
        %930 = vmatpush.bf16.msra.mxu0 0
        %931 = vmatpush.bf16.msra.mxu0 0
        %932 = vmatpush.bf16.msra.mxu0 0
        %933 = vmatpush.bf16.msra.mxu0 0
        %934 = vmatpush.bf16.msra.mxu0 0
        %935 = vmatpush.bf16.msra.mxu0 %v926
        %936 = vmatmul.bf16.gmra.mxu0 %v923
        %v937 = vpop.f32.mrf.mxu0
        %v938 = vadd.f32 %v920, %v937
        %v939 = vpop.f32.mrf.mxu0
        %940 = vdwg.mxu0
        %941 = vxpose.xlu0.b32.start [1/16] %v938, 128
        %942 = vxpose.xlu0.b32.cont [2/16] 0.0, 128
        %943 = vxpose.xlu0.b32.cont [3/16] 0.0, 128
        %944 = vxpose.xlu0.b32.cont [4/16] 0.0, 128
        %945 = vxpose.xlu0.b32.cont [5/16] 0.0, 128
        %946 = vxpose.xlu0.b32.cont [6/16] 0.0, 128
        %947 = vxpose.xlu0.b32.cont [7/16] 0.0, 128
        %948 = vxpose.xlu0.b32.cont [8/16] 0.0, 128
        %949 = vxpose.xlu0.b32.cont [9/16] 0.0, 128
        %950 = vxpose.xlu0.b32.cont [10/16] 0.0, 128
        %951 = vxpose.xlu0.b32.cont [11/16] 0.0, 128
        %952 = vxpose.xlu0.b32.cont [12/16] 0.0, 128
        %953 = vxpose.xlu0.b32.cont [13/16] 0.0, 128
        %954 = vxpose.xlu0.b32.cont [14/16] 0.0, 128
        %955 = vxpose.xlu0.b32.cont [15/16] 0.0, 128
        %956 = vxpose.xlu0.b32.end [16/16] 0.0, 128
        %v957 = vpop.trf.xlu0
        %v958 = vpop.trf.xlu0
        %v959 = vpop.trf.xlu0
        %v960 = vpop.trf.xlu0
        %v961 = vpop.trf.xlu0
        %v962 = vpop.trf.xlu0
        %v963 = vpop.trf.xlu0
        %v964 = vpop.trf.xlu0
        %v965 = vpop.trf.xlu0
        %v966 = vpop.trf.xlu0
        %v967 = vpop.trf.xlu0
        %v968 = vpop.trf.xlu0
        %v969 = vpop.trf.xlu0
        %v970 = vpop.trf.xlu0
        %v971 = vpop.trf.xlu0
        %v972 = vpop.trf.xlu0
        %vm973 = vcmask 57344
        %974 = vst.msk [vmem:[%s371] sm:$0x1] %vm973, %v957
        %s975 = sand.u32 %s211, 1
        %s976 = scalar_lea.sflag [#allocation6], %s975
        %s977 = sand.u32 %s211, 1
        %s978 = smul.addr %s977, 4
        %s979 = scalar_lea.vmem [#allocation5], %s978
        %s980 = sand.u32 %s30, 1
        %s981 = scalar_lea.sflag [#allocation8], %s980
        %s982 = sand.u32 %s237, 1
        %s983 = smul.addr %s982, 8
        %s984 = scalar_lea.vmem [#allocation7], %s983
        %s985 = sand.u32 %s30, 1
        %s986 = scalar_lea.sflag [#allocation8], %s985
        %s987 = sand.u32 %s263, 1
        %s988 = scalar_lea.vmem [#allocation9], %s987
        // Predicated region
        $region53: #{tpu_custom_call.1} parent=51 // pred_check
          %p989 = pneg %p221
        $region54: #{tpu_custom_call.1} parent=51 // pred_check_branch
          %991 = sbr.rel (%p989) target = $region56
        $region55: #{tpu_custom_call.1} parent=51 // pred_region
          %993 = vsyncadd %s976, 0
          %s994 = smul.addr %s30, 4
          %s995 = scalar_lea.hbm %s8, %s994
          %s997 = sshll.u32 %s979, 4
          %s998 = int_to_ptr.vmem [resolvable:$true] %s997
          %s999 = sshll.u32 %s995, 4
          %s1000 = int_to_ptr.hbm [resolvable:$true] %s999
          %1002 = dma.vmem_to_hbm [thread:$0]  %s998, 64, %s1000, %s976
        $region56: #{tpu_custom_call.1} parent=51 // pred_fallthru
          _
        // Predicated region
        $region57: #{tpu_custom_call.1} parent=51 // pred_check
          %p1003 = pneg %p247
        $region58: #{tpu_custom_call.1} parent=51 // pred_check_branch
          %1005 = sbr.rel (%p1003) target = $region60
        $region59: #{tpu_custom_call.1} parent=51 // pred_region
          %1007 = vsyncadd %s981, 0
          %s1008 = smul.addr %s30, 8
          %s1009 = scalar_lea.hbm %s9, %s1008
          %s1011 = sshll.u32 %s984, 4
          %s1012 = int_to_ptr.vmem [resolvable:$true] %s1011
          %s1013 = sshll.u32 %s1009, 4
          %s1014 = int_to_ptr.hbm [resolvable:$true] %s1013
          %1016 = dma.vmem_to_hbm [thread:$0]  %s1012, 128, %s1014, %s981
        $region60: #{tpu_custom_call.1} parent=51 // pred_fallthru
          _
        // Predicated region
        $region61: #{tpu_custom_call.1} parent=51 // pred_check
          %p1017 = pneg %p273
        $region62: #{tpu_custom_call.1} parent=51 // pred_check_branch
          %1019 = sbr.rel (%p1017) target = $region64
        $region63: #{tpu_custom_call.1} parent=51 // pred_region
          %1021 = vsyncadd %s986, 0
          %s1022 = scalar_lea.hbm %s10, %s30
          %s1024 = sshll.u32 %s988, 4
          %s1025 = int_to_ptr.vmem [resolvable:$true] %s1024
          %s1026 = sshll.u32 %s1022, 4
          %s1027 = int_to_ptr.hbm [resolvable:$true] %s1026
          %1029 = dma.vmem_to_hbm [thread:$0]  %s1025, 16, %s1027, %s986
        $region64: #{tpu_custom_call.1} parent=51 // pred_fallthru
          _
      $region52: #{tpu_custom_call.1} parent=5 // pred_fallthru
        _
      %p1030 = scmp.le.s32.totalorder 2, %s25
      // Predicated region
      $region65: #{tpu_custom_call.1} parent=5 // pred_check
        %p1031 = pneg %p1030
      $region66: #{tpu_custom_call.1} parent=5 // pred_check_branch
        %1033 = sbr.rel (%p1031) target = $region68
      $region67: #{tpu_custom_call.1} parent=5 // pred_region
        %s1034 = ssub.s32 %s25, 2
        // Predicated region
        $region69: #{tpu_custom_call.1} parent=67 // pred_check
          %p1035 = pneg %p227
        $region70: #{tpu_custom_call.1} parent=67 // pred_check_branch
          %1037 = sbr.rel (%p1035) target = $region72
        $region71: #{tpu_custom_call.1} parent=67 // pred_region
          %s1038 = sand.u32 %s212, 1
          %s1039 = scalar_lea.sflag [#allocation6], %s1038
          %s1040 = sand.u32 %s212, 1
          %s1041 = smul.addr %s1040, 4
          %s1042 = scalar_lea.vmem [#allocation5], %s1041
          %1044 = dma.done %s1039, 64
        $region72: #{tpu_custom_call.1} parent=67 // pred_fallthru
          _
        // Predicated region
        $region73: #{tpu_custom_call.1} parent=67 // pred_check
          %p1045 = pneg %p253
        $region74: #{tpu_custom_call.1} parent=67 // pred_check_branch
          %1047 = sbr.rel (%p1045) target = $region76
        $region75: #{tpu_custom_call.1} parent=67 // pred_region
          %s1048 = sand.u32 %s31, 1
          %s1049 = scalar_lea.sflag [#allocation8], %s1048
          %s1050 = sand.u32 %s238, 1
          %s1051 = smul.addr %s1050, 8
          %s1052 = scalar_lea.vmem [#allocation7], %s1051
          %1054 = dma.done %s1049, 128
        $region76: #{tpu_custom_call.1} parent=67 // pred_fallthru
          _
        // Predicated region
        $region77: #{tpu_custom_call.1} parent=67 // pred_check
          %p1055 = pneg %p279
        $region78: #{tpu_custom_call.1} parent=67 // pred_check_branch
          %1057 = sbr.rel (%p1055) target = $region80
        $region79: #{tpu_custom_call.1} parent=67 // pred_region
          %s1058 = sand.u32 %s31, 1
          %s1059 = scalar_lea.sflag [#allocation8], %s1058
          %s1060 = sand.u32 %s264, 1
          %s1061 = scalar_lea.vmem [#allocation9], %s1060
          %1063 = dma.done %s1059, 16
        $region80: #{tpu_custom_call.1} parent=67 // pred_fallthru
          _
      $region68: #{tpu_custom_call.1} parent=5 // pred_fallthru
        _
    $region6: #{tpu_custom_call.1} parent=1 // loop_footer
      %s29 = sadd.s32 1, %s25
    $region7: #{tpu_custom_call.1} parent=1 // loop_footer_branch
      %24 = sbr.rel target = $region3
    $region8: #{tpu_custom_call.1} parent=1 // loop_exit
      _
    %1064 = vsyncpa [#allocation6], 1
    %s1065 = scalar_lea.sflag [#allocation6], 1
    %1066 = vsyncpa %s1065, 1
    %1067 = vsyncpa [#allocation8], 1
    %s1068 = scalar_lea.sflag [#allocation8], 1
    %1069 = vsyncpa %s1068, 1

</llo_original>
